<compile_context>
chip_gen: v5e
topology: v5e:2x2
jax: 0.10.0
libtpu: 0.0.40
codegen_flags: <defaults>
</compile_context>

<pallas_src>
import functools

import jax
import jax.numpy as jnp
from jax.experimental import pallas as pl
from jax.experimental.pallas import tpu as pltpu


def _make_divisible(v, divisor, min_value=None):
    if min_value is None:
        min_value = divisor
    new_v = max(min_value, int(v + divisor / 2) // divisor * divisor)
    if new_v < 0.9 * v:
        new_v += divisor
    return new_v


# ---------------------------------------------------------------------------
# Kernels
# ---------------------------------------------------------------------------

def _excite(pooled, w1t_ref, b1_ref, w2t_ref, b2_ref):
    """pooled (M, C) f32 -> gate (M, C) f32: Linear -> ReLU -> Linear -> h_sigmoid."""
    h = jnp.dot(pooled, w1t_ref[...], preferred_element_type=jnp.float32)
    h = jnp.maximum(h + b1_ref[...], 0.0)
    z = jnp.dot(h, w2t_ref[...], preferred_element_type=jnp.float32) + b2_ref[...]
    return jnp.clip(z + 3.0, 0.0, 6.0) * (1.0 / 6.0)          # h_sigmoid


def _se_kernel_fused(inv_hw, x_ref, w1t_ref, b1_ref, w2t_ref, b2_ref, o_ref):
    """grid=(B/Bt,): pool -> excite -> scale for a (Bt, C, HW) slab."""
    # First pass over the block: streaming reduce (f32 accumulation).
    pooled = jnp.sum(x_ref[...], axis=-1, dtype=jnp.float32) * inv_hw   # (Bt, C)
    gate = _excite(pooled, w1t_ref, b1_ref, w2t_ref, b2_ref)            # (Bt, C)
    # Second pass: re-read the ref (do NOT keep the slab live across the gate
    # matmuls -> avoids register spills); fused load * mul * store stream.
    o_ref[...] = (x_ref[...].astype(jnp.float32) * gate[:, :, None]).astype(o_ref.dtype)


def _pool_excite_kernel(inv_hw, hw, tile, need_mask,
                        x_ref, w1t_ref, b1_ref, w2t_ref, b2_ref,
                        gate_ref, psum_ref):
    """grid=(B, T): stream x tiles, accumulate pooled sum, emit gate (1, C, 1)."""
    t = pl.program_id(1)

    @pl.when(t == 0)
    def _init():
        psum_ref[...] = jnp.zeros_like(psum_ref)

    x = x_ref[...]                                            # (1, C, tile)
    if need_mask:
        # Last tile overhangs HW: zero the out-of-bounds lanes before summing
        # (OOB input reads are undefined without wrapper-side padding).
        lane = jax.lax.broadcasted_iota(jnp.int32, x.shape, 2)
        valid = (t * tile + lane) < hw
        part = jnp.sum(jnp.where(valid, x.astype(jnp.float32), 0.0), axis=-1)
    else:
        part = jnp.sum(x, axis=-1, dtype=jnp.float32)
    psum_ref[...] += part                                     # (1, C) f32

    @pl.when(t == pl.num_programs(1) - 1)
    def _finalize():
        pooled = psum_ref[...] * inv_hw                       # true mean
        gate = _excite(pooled, w1t_ref, b1_ref, w2t_ref, b2_ref)
        gate_ref[...] = gate[:, :, None]                      # (1, C, 1)


def _scale_kernel(x_ref, gate_ref, o_ref):
    """grid=(B, T): minimal streaming scale pass (load, mul, full store)."""
    o_ref[...] = (x_ref[...].astype(jnp.float32) * gate_ref[...]).astype(o_ref.dtype)


# ---------------------------------------------------------------------------
# Wrapper
# ---------------------------------------------------------------------------

def _vmem_limit_bytes():
    """Per-generation scoped-VMEM budget: ~100 MiB on 128-MiB parts, ~48 MiB on v7x."""
    try:
        cap = int(pltpu.get_tpu_info().vmem_capacity_bytes)
    except Exception:
        cap = 64 * 1024 * 1024            # conservative fallback (v7x physical VMEM)
    if cap <= 0:
        cap = 64 * 1024 * 1024
    return max(min(100 * 1024 * 1024, cap - 16 * 1024 * 1024), 32 * 1024 * 1024)


def se_layer(x_nchw, w1, b1, w2, b2, *, spatial_tile=None, donate_x=False):
    """SELayer forward.  x_nchw: (B, C, H, W) -> (B, C, H, W).

    donate_x=True aliases x to the output (only if the caller no longer needs x).
    """
    B, C, H, W = x_nchw.shape
    hidden = w1.shape[0]
    HW = H * W
    inv_hw = 1.0 / float(HW)
    dtype = x_nchw.dtype
    itemsize = jnp.dtype(dtype).itemsize

    if spatial_tile is not None and spatial_tile < HW and spatial_tile % 128 != 0:
        raise ValueError("spatial_tile must be a multiple of 128")

    # One-time layout prep (tiny): transposed f32 weights, 2-D biases.
    w1t = jnp.transpose(w1).astype(jnp.float32)               # (C, hidden)
    w2t = jnp.transpose(w2).astype(jnp.float32)               # (hidden, C)
    b1_2d = jnp.reshape(b1, (1, hidden)).astype(jnp.float32)
    b2_2d = jnp.reshape(b2, (1, C)).astype(jnp.float32)

    x_flat = jnp.reshape(x_nchw, (B, C, HW))                  # no padding copy

    vmem_limit = _vmem_limit_bytes()
    weight_bytes = 4 * (2 * C * hidden + hidden + C)
    # Streaming budget for x blocks: leave room for (double-buffered) weights,
    # gate / psum scratch and Mosaic internal scratch.
    stream_budget = max(vmem_limit - 2 * weight_bytes - (2 << 20), 4 << 20)

    slab_bytes = C * HW * itemsize
    fused_block_max = stream_budget // 4      # 2 input + 2 output block buffers
    use_fused = (slab_bytes <= fused_block_max
                 and (spatial_tile is None or spatial_tile >= HW))

    aliases = {0: 0} if donate_x else {}

    if use_fused:
        # Pack several batch elements per grid step (largest divisor of B that
        # fits the block budget) to amortize per-step overhead.
        bt = max(1, min(B, fused_block_max // max(slab_bytes, 1)))
        while B % bt:
            bt -= 1
        out_flat = pl.pallas_call(
            functools.partial(_se_kernel_fused, inv_hw),
            out_shape=jax.ShapeDtypeStruct((B, C, HW), dtype),
            grid=(B // bt,),
            in_specs=[
                pl.BlockSpec((bt, C, HW), lambda b: (b, 0, 0)),   # x (streamed)
                pl.BlockSpec((C, hidden), lambda b: (0, 0)),      # W1^T (resident)
                pl.BlockSpec((1, hidden), lambda b: (0, 0)),      # b1
                pl.BlockSpec((hidden, C), lambda b: (0, 0)),      # W2^T
                pl.BlockSpec((1, C), lambda b: (0, 0)),           # b2
            ],
            out_specs=pl.BlockSpec((bt, C, HW), lambda b: (b, 0, 0)),
            compiler_params=pltpu.CompilerParams(
                dimension_semantics=("parallel",),
                vmem_limit_bytes=vmem_limit),
            input_output_aliases=aliases,
        )(x_flat, w1t, b1_2d, w2t, b2_2d)
        return jnp.reshape(out_flat, (B, C, H, W))

    # ------------------------------------------------------------------
    # Streaming fallback: pass 1 (pool + excite), pass 2 (scale).
    # ------------------------------------------------------------------
    def _pick_tile(n_stream_bufs):
        if spatial_tile is not None:
            t = int(spatial_tile)
        else:
            t = (stream_budget // (n_stream_bufs * C * itemsize)) // 128 * 128
            t = max(128, t)
        if t >= HW:
            return HW, 1, False            # full-extent block: no 128 rule, no mask
        return t, -(-HW // t), (HW % t != 0)

    pool_tile, pool_nt, pool_mask = _pick_tile(2)   # pool pass: input buffers only
    scale_tile, scale_nt, _ = _pick_tile(4)         # scale pass: in + out buffers

    # Pass 1: streaming pool + excite -> per-batch gate (B, C, 1) f32.
    gate = pl.pallas_call(
        functools.partial(_pool_excite_kernel, inv_hw, HW, pool_tile, pool_mask),
        out_shape=jax.ShapeDtypeStruct((B, C, 1), jnp.float32),
        grid=(B, pool_nt),
        in_specs=[
            pl.BlockSpec((1, C, pool_tile), lambda b, t: (b, 0, t)),
            pl.BlockSpec((C, hidden), lambda b, t: (0, 0)),
            pl.BlockSpec((1, hidden), lambda b, t: (0, 0)),
            pl.BlockSpec((hidden, C), lambda b, t: (0, 0)),
            pl.BlockSpec((1, C), lambda b, t: (0, 0)),
        ],
        out_specs=pl.BlockSpec((1, C, 1), lambda b, t: (b, 0, 0)),
        scratch_shapes=[pltpu.VMEM((1, C), jnp.float32)],     # pooled-sum accumulator
        compiler_params=pltpu.CompilerParams(
            dimension_semantics=("parallel", "arbitrary"),
            vmem_limit_bytes=vmem_limit),
    )(x_flat, w1t, b1_2d, w2t, b2_2d)

    # Pass 2: streaming scale (partial last tile handled by clipped writeback).
    out_flat = pl.pallas_call(
        _scale_kernel,
        out_shape=jax.ShapeDtypeStruct((B, C, HW), dtype),
        grid=(B, scale_nt),
        in_specs=[
            pl.BlockSpec((1, C, scale_tile), lambda b, t: (b, 0, t)),
            pl.BlockSpec((1, C, 1), lambda b, t: (b, 0, 0)),   # gate (resident per b)
        ],
        out_specs=pl.BlockSpec((1, C, scale_tile), lambda b, t: (b, 0, t)),
        compiler_params=pltpu.CompilerParams(
            dimension_semantics=("parallel", "parallel"),
            vmem_limit_bytes=vmem_limit),
        input_output_aliases=aliases,
    )(x_flat, gate)

    return jnp.reshape(out_flat, (B, C, H, W))


# ---------------------------------------------------------------------------
# Reference + test
# ---------------------------------------------------------------------------

def _reference(x_nchw, w1, b1, w2, b2):
    """Pure-JAX reference mirroring the PyTorch forward (f32 math)."""
    xf = x_nchw.astype(jnp.float32)
    pooled = jnp.mean(xf, axis=(2, 3))                        # (B, C)
    h = jnp.maximum(pooled @ w1.T + b1, 0.0)                  # (B, hidden)
    z = h @ w2.T + b2                                         # (B, C)
    y = jnp.clip(z + 3.0, 0.0, 6.0) / 6.0
    return xf * y[:, :, None, None]


if __name__ == "__main__":
    B, C, H, W = 2, 4, 16, 16
    reduction = 4
    hidden = _make_divisible(C // reduction, 8)               # = 8 for C=4

    key = jax.random.PRNGKey(0)
    kx, kw1, kb1, kw2, kb2, kx2 = jax.random.split(key, 6)

    x = jax.random.normal(kx, (B, C, H, W), dtype=jnp.float32)

    bound1 = 1.0 / (C ** 0.5)
    w1 = jax.random.uniform(kw1, (hidden, C), jnp.float32, -bound1, bound1)
    b1 = jax.random.uniform(kb1, (hidden,), jnp.float32, -bound1, bound1)
    bound2 = 1.0 / (hidden ** 0.5)
    w2 = jax.random.uniform(kw2, (C, hidden), jnp.float32, -bound2, bound2)
    b2 = jax.random.uniform(kb2, (C,), jnp.float32, -bound2, bound2)

    ref = _reference(x, w1, b1, w2, b2)

    # Path 1: fused single-pass (full-extent blocks, batch-packed grid).
    out_fused = jax.block_until_ready(se_layer(x, w1, b1, w2, b2))
    assert out_fused.shape == (B, C, H, W)
    assert jnp.allclose(out_fused, ref, atol=1e-5, rtol=1e-5), "fused mismatch"

    # Path 2: force the two-pass streaming path (tile 128 < HW=256, T=2).
    out_stream = jax.block_until_ready(se_layer(x, w1, b1, w2, b2, spatial_tile=128))
    assert jnp.allclose(out_stream, ref, atol=1e-5, rtol=1e-5), "streaming mismatch"

    # Path 3: streaming with a non-multiple-of-128 spatial size (HW=400):
    # exercises the in-kernel pooling mask and the clipped partial writeback.
    x2 = jax.random.normal(kx2, (B, C, 20, 20), dtype=jnp.float32)
    ref2 = _reference(x2, w1, b1, w2, b2)
    out_mask = jax.block_until_ready(se_layer(x2, w1, b1, w2, b2, spatial_tile=128))
    assert jnp.allclose(out_mask, ref2, atol=1e-5, rtol=1e-5), "masked-tile mismatch"

    # Path 4: bf16 activations (dtype-generality of stores / f32 accumulation).
    xb = x.astype(jnp.bfloat16)
    refb = _reference(xb, w1, b1, w2, b2)
    outb = jax.block_until_ready(se_layer(xb, w1, b1, w2, b2))
    assert outb.dtype == jnp.bfloat16
    assert jnp.allclose(outb.astype(jnp.float32), refb, atol=3e-2, rtol=3e-2), "bf16 mismatch"

    print("KERNEL_OK")
</pallas_src>

<mosaic_0001>
module attributes {stable_mosaic.version = 11 : i64} {
  func.func @_se_kernel_fused(%arg0: i32, %arg1: memref<2x4x256xf32, #tpu.memory_space<vmem>>, %arg2: memref<4x8xf32, #tpu.memory_space<vmem>>, %arg3: memref<1x8xf32, #tpu.memory_space<vmem>>, %arg4: memref<8x4xf32, #tpu.memory_space<vmem>>, %arg5: memref<1x4xf32, #tpu.memory_space<vmem>>, %arg6: memref<2x4x256xf32, #tpu.memory_space<vmem>>) attributes {dimension_semantics = [#tpu.dimension_semantics<parallel>], iteration_bounds = array<i64: 1>, scalar_prefetch = 0 : i64, scratch_operands = 0 : i64, tpu.core_type = #tpu.core_type<tc>, window_params = [{transform_indices = @transform_0, window_bounds = array<i64: 2, 4, 256>}, {pipeline_mode = #tpu.pipeline_mode<synchronous>, transform_indices = @transform_1, window_bounds = array<i64: 4, 8>}, {pipeline_mode = #tpu.pipeline_mode<synchronous>, transform_indices = @transform_2, window_bounds = array<i64: 1, 8>}, {pipeline_mode = #tpu.pipeline_mode<synchronous>, transform_indices = @transform_3, window_bounds = array<i64: 8, 4>}, {pipeline_mode = #tpu.pipeline_mode<synchronous>, transform_indices = @transform_4, window_bounds = array<i64: 1, 4>}, {transform_indices = @transform_5, window_bounds = array<i64: 2, 4, 256>}]} {
    %c0 = arith.constant 0 : index
    %c0_0 = arith.constant 0 : index
    %c0_1 = arith.constant 0 : index
    %0 = vector.load %arg1[%c0, %c0_0, %c0_1] : memref<2x4x256xf32, #tpu.memory_space<vmem>>, vector<2x4x256xf32>
    %cst = arith.constant dense<0.000000e+00> : vector<2x4xf32>
    %1 = vector.multi_reduction <add>, %0, %cst [2] : vector<2x4x256xf32> to vector<2x4xf32>
    %cst_2 = arith.constant 3.906250e-03 : f32
    %2 = vector.broadcast %cst_2 : f32 to vector<2x4xf32>
    %3 = arith.mulf %1, %2 : vector<2x4xf32>
    %c0_3 = arith.constant 0 : index
    %c0_4 = arith.constant 0 : index
    %4 = vector.load %arg2[%c0_3, %c0_4] : memref<4x8xf32, #tpu.memory_space<vmem>>, vector<4x8xf32>
    %cst_5 = arith.constant dense<0.000000e+00> : vector<2x8xf32>
    %5 = tpu.matmul %3, %4, %cst_5 {dimension_numbers = #tpu.dot_dimension_numbers<[1], [0], [0], [1], [0, 0, 1, 1], [], []>} : vector<2x4xf32>, vector<4x8xf32>, vector<2x8xf32> -> vector<2x8xf32>
    %c0_6 = arith.constant 0 : index
    %c0_7 = arith.constant 0 : index
    %6 = vector.load %arg3[%c0_6, %c0_7] : memref<1x8xf32, #tpu.memory_space<vmem>>, vector<1x8xf32>
    %7 = vector.broadcast %6 : vector<1x8xf32> to vector<2x8xf32>
    %8 = arith.addf %5, %7 : vector<2x8xf32>
    %cst_8 = arith.constant 0.000000e+00 : f32
    %9 = vector.broadcast %cst_8 : f32 to vector<2x8xf32>
    %10 = arith.maximumf %8, %9 : vector<2x8xf32>
    %c0_9 = arith.constant 0 : index
    %c0_10 = arith.constant 0 : index
    %11 = vector.load %arg4[%c0_9, %c0_10] : memref<8x4xf32, #tpu.memory_space<vmem>>, vector<8x4xf32>
    %cst_11 = arith.constant dense<0.000000e+00> : vector<2x4xf32>
    %12 = tpu.matmul %10, %11, %cst_11 {dimension_numbers = #tpu.dot_dimension_numbers<[1], [0], [0], [1], [0, 0, 1, 1], [], []>} : vector<2x8xf32>, vector<8x4xf32>, vector<2x4xf32> -> vector<2x4xf32>
    %c0_12 = arith.constant 0 : index
    %c0_13 = arith.constant 0 : index
    %13 = vector.load %arg5[%c0_12, %c0_13] : memref<1x4xf32, #tpu.memory_space<vmem>>, vector<1x4xf32>
    %14 = vector.broadcast %13 : vector<1x4xf32> to vector<2x4xf32>
    %15 = arith.addf %12, %14 : vector<2x4xf32>
    %cst_14 = arith.constant 3.000000e+00 : f32
    %16 = vector.broadcast %cst_14 : f32 to vector<2x4xf32>
    %17 = arith.addf %15, %16 : vector<2x4xf32>
    %cst_15 = arith.constant 0.000000e+00 : f32
    %cst_16 = arith.constant 6.000000e+00 : f32
    %18 = vector.broadcast %cst_15 : f32 to vector<2x4xf32>
    %19 = arith.maximumf %18, %17 : vector<2x4xf32>
    %20 = vector.broadcast %cst_16 : f32 to vector<2x4xf32>
    %21 = arith.minimumf %20, %19 : vector<2x4xf32>
    %cst_17 = arith.constant 0.166666672 : f32
    %22 = vector.broadcast %cst_17 : f32 to vector<2x4xf32>
    %23 = arith.mulf %21, %22 : vector<2x4xf32>
    %c0_18 = arith.constant 0 : index
    %c0_19 = arith.constant 0 : index
    %c0_20 = arith.constant 0 : index
    %24 = vector.load %arg1[%c0_18, %c0_19, %c0_20] : memref<2x4x256xf32, #tpu.memory_space<vmem>>, vector<2x4x256xf32>
    %25 = vector.shape_cast %23 : vector<2x4xf32> to vector<2x4x1xf32>
    %26 = vector.broadcast %25 : vector<2x4x1xf32> to vector<2x4x256xf32>
    %27 = arith.mulf %24, %26 : vector<2x4x256xf32>
    %c0_21 = arith.constant 0 : index
    %c0_22 = arith.constant 0 : index
    %c0_23 = arith.constant 0 : index
    %28 = vector.load %arg6[%c0_21, %c0_22, %c0_23] : memref<2x4x256xf32, #tpu.memory_space<vmem>>, vector<2x4x256xf32>
    tpu.vector_store %arg6[%c0_21, %c0_22, %c0_23], %27 {strides = array<i32>} : memref<2x4x256xf32, #tpu.memory_space<vmem>>, vector<2x4x256xf32>,
    return
  }
  func.func @transform_0(%arg0: i32) -> (i32, i32, i32) {
    %c0_i32 = arith.constant 0 : i32
    %c0_i32_0 = arith.constant 0 : i32
    %c0_i32_1 = arith.constant 0 : i32
    return %arg0, %c0_i32, %c0_i32_0 : i32, i32, i32
  }
  func.func @transform_1(%arg0: i32) -> (i32, i32) {
    %c0_i32 = arith.constant 0 : i32
    %c0_i32_0 = arith.constant 0 : i32
    %c0_i32_1 = arith.constant 0 : i32
    return %c0_i32, %c0_i32_0 : i32, i32
  }
  func.func @transform_2(%arg0: i32) -> (i32, i32) {
    %c0_i32 = arith.constant 0 : i32
    %c0_i32_0 = arith.constant 0 : i32
    %c0_i32_1 = arith.constant 0 : i32
    return %c0_i32, %c0_i32_0 : i32, i32
  }
  func.func @transform_3(%arg0: i32) -> (i32, i32) {
    %c0_i32 = arith.constant 0 : i32
    %c0_i32_0 = arith.constant 0 : i32
    %c0_i32_1 = arith.constant 0 : i32
    return %c0_i32, %c0_i32_0 : i32, i32
  }
  func.func @transform_4(%arg0: i32) -> (i32, i32) {
    %c0_i32 = arith.constant 0 : i32
    %c0_i32_0 = arith.constant 0 : i32
    %c0_i32_1 = arith.constant 0 : i32
    return %c0_i32, %c0_i32_0 : i32, i32
  }
  func.func @transform_5(%arg0: i32) -> (i32, i32, i32) {
    %c0_i32 = arith.constant 0 : i32
    %c0_i32_0 = arith.constant 0 : i32
    %c0_i32_1 = arith.constant 0 : i32
    return %arg0, %c0_i32, %c0_i32_0 : i32, i32, i32
  }
}

</mosaic_0001>

<llo_original>
// kernel: tpu_custom_call.1
$region0: #{tpu_custom_call.1}
  #allocation0 [shape = 'u32[]', space=smem, size = 0x4, offset = 0x4, fixed_abs, tag = 'smem constant byte address 0x4 - core index']
  #allocation1 [shape = 'u32[72,128]{1,0:T(1,128)}', space=vmem, size = 0x9000, scoped, tag = 'internal scratch']
  %s0 = inlined_call_operand.hbm [shape: f32[2,4,256], index: 0, kind: input, shape index: {}]
  %s1 = inlined_call_operand.vmem [shape: f32[4,8], index: 1, kind: input, shape index: {}]
  %s2 = inlined_call_operand.vmem [shape: f32[1,8], index: 2, kind: input, shape index: {}]
  %s3 = inlined_call_operand.vmem [shape: f32[8,4], index: 3, kind: input, shape index: {}]
  %s4 = inlined_call_operand.vmem [shape: f32[1,4], index: 4, kind: input, shape index: {}]
  %s5 = inlined_call_operand.hbm [shape: f32[2,4,256], index: 5, kind: output, shape index: {}]
  %s6 = sld [smem:[#allocation0]]
  $region34: #{tpu_custom_call.1} parent=0
    _
  %s8 = ssub.s32 1, %s6
  %s9 = scalar_select 0, %s8, %s6
  $region1: #{tpu_custom_call.1} parent=0
    #allocation2 [shape = 'u8[8192]{0}', space=vmem, size = 0x2000, scoped, tag = 'input window, operand 0, single buffered']
    #allocation3 [shape = 's32[1]{0}', space=sflag, size = 0x4, scoped, tag = 'scoped memory for tpu_custom_call.1']
    #allocation4 [shape = 's32[1]{0}', space=sflag, size = 0x4, scoped, tag = 'scoped memory for tpu_custom_call.1']
    #allocation5 [shape = 'u8[8192]{0}', space=vmem, size = 0x2000, scoped, tag = 'output window, operand 0, single buffered']
    %10 = vsyncpa [#allocation3], 0
    %11 = vsyncpa [#allocation4], 0
    // Predicated region
    $region2: #{tpu_custom_call.1} parent=1 // pred_check
      _
    $region3: #{tpu_custom_call.1} parent=1 // pred_check_branch
      %13 = sbr.rel (0) target = $region5
    $region4: #{tpu_custom_call.1} parent=1 // pred_region
      %15 = vsyncadd [#allocation3], 0
      %s16 = sshll.u32 %s0, 4
      %s17 = int_to_ptr.hbm [resolvable:$true] %s16
      %s18 = sshll.u32 [#allocation2], 4
      %s19 = int_to_ptr.vmem [resolvable:$true] %s18
      %24 = dma.hbm_to_vmem [thread:$0]  %s17, 256, %s19, [#allocation3], 128, 128, 8
    $region5: #{tpu_custom_call.1} parent=1 // pred_fallthru
      _
    // Predicated region
    $region6: #{tpu_custom_call.1} parent=1 // pred_check
      _
    $region7: #{tpu_custom_call.1} parent=1 // pred_check_branch
      %26 = sbr.rel (0) target = $region9
    $region8: #{tpu_custom_call.1} parent=1 // pred_region
      _
    $region9: #{tpu_custom_call.1} parent=1 // pred_fallthru
      _
    // Predicated region
    $region10: #{tpu_custom_call.1} parent=1 // pred_check
      _
    $region11: #{tpu_custom_call.1} parent=1 // pred_check_branch
      %28 = sbr.rel (0) target = $region13
    $region12: #{tpu_custom_call.1} parent=1 // pred_region
      _
    $region13: #{tpu_custom_call.1} parent=1 // pred_fallthru
      _
    // Predicated region
    $region14: #{tpu_custom_call.1} parent=1 // pred_check
      _
    $region15: #{tpu_custom_call.1} parent=1 // pred_check_branch
      %30 = sbr.rel (0) target = $region17
    $region16: #{tpu_custom_call.1} parent=1 // pred_region
      _
    $region17: #{tpu_custom_call.1} parent=1 // pred_fallthru
      _
    // Predicated region
    $region18: #{tpu_custom_call.1} parent=1 // pred_check
      _
    $region19: #{tpu_custom_call.1} parent=1 // pred_check_branch
      %32 = sbr.rel (0) target = $region21
    $region20: #{tpu_custom_call.1} parent=1 // pred_region
      _
    $region21: #{tpu_custom_call.1} parent=1 // pred_fallthru
      _
    // Predicated region
    $region22: #{tpu_custom_call.1} parent=1 // pred_check
      _
    $region23: #{tpu_custom_call.1} parent=1 // pred_check_branch
      %34 = sbr.rel (0) target = $region25
    $region24: #{tpu_custom_call.1} parent=1 // pred_region
      %36 = dma.done [#allocation3], 256
    $region25: #{tpu_custom_call.1} parent=1 // pred_fallthru
      _
    %v37 = vld [vmem:[#allocation2] sm:$0xff]
    %v38 = vld [vmem:[#allocation2 + $0x8] sm:$0xff]
    %41 = vst [vmem:[#allocation1] ss:$2 sm:$0xff] %v37
    %v42 = vld.sshfl [vmem:[#allocation1] sm:$0xff pattern:$0x75316420]
    %v43 = vld.sshfl [vmem:[#allocation1 + $0x8] sm:$0xff pattern:$0x75316420]
    %s44 = scalar_lea.vmem [#allocation1], 16
    %45 = vst [vmem:[%s44] ss:$2 sm:$0xff] %v38
    %v46 = vld.sshfl [vmem:[#allocation1 + $0x10] sm:$0xff pattern:$0x75316420]
    %v47 = vld.sshfl [vmem:[#allocation1 + $0x18] sm:$0xff pattern:$0x75316420]
    %vm52 = vcmask 1043456
    %v53 = vsel %vm52, %v42, 0.0
    %v54 = vsel %vm52, %v43, 0.0
    %v55 = vadd.f32 %v53, %v54
    %56 = vadd.xlane.f32.xlu0 %v55
    %v57 = vpop.xlane.xlu0 %56
    %v58 = vsel %vm52, %v46, 0.0
    %v59 = vsel %vm52, %v47, 0.0
    %v60 = vadd.f32 %v58, %v59
    %61 = vadd.xlane.f32.xlu0 %v60
    %v62 = vpop.xlane.xlu0 %61
    %v63 = vmul.f32 %v57, 0.00390625
    %v64 = vmul.f32 %v62, 0.00390625
    %v65 = vld [vmem:[%s1] sm:$0xf]
    %v66 = vld [vmem:[%s2] sm:$0x1]
    %v68 = vperm.slane %v66, 0
    %v72 = vlaneseq
    %v73 = vand.u32 %v72, 127
    %v74 = vperm.slane %v63, %v73
    %v75 = vperm.slane %v64, %v73
    %vm76 = vcmask 1041409
    %v77 = vsel %vm76, %v75, %v74
    %vm78 = vcmask 31744
    %v79 = vsel %vm78, %v77, 0
    %v82 = vsel %vm52, %v65, 0
    %84 = vmatpush.msra.mxu0 0.0
    %85 = vmatpush.msra.mxu0 0.0
    %86 = vmatpush.msra.mxu0 0.0
    %87 = vmatpush.msra.mxu0 0.0
    %88 = vmatpush.msra.mxu0 0.0
    %89 = vmatpush.msra.mxu0 0.0
    %90 = vmatpush.msra.mxu0 0.0
    %91 = vmatpush.msra.mxu0 0.0
    %92 = vmatpush.msra.mxu0 0.0
    %93 = vmatpush.msra.mxu0 0.0
    %94 = vmatpush.msra.mxu0 0.0
    %95 = vmatpush.msra.mxu0 0.0
    %96 = vmatpush.msra.mxu0 0.0
    %97 = vmatpush.msra.mxu0 0.0
    %98 = vmatpush.msra.mxu0 0.0
    %99 = vmatpush.msra.mxu0 %v82
    %100 = vmatmul.f32.gmra.mxu0 %v79
    %v101 = vpop.f32.mrf.mxu0
    %v102 = vadd.f32 %v68, %v101
    %103 = vdwg.mxu0
    %v104 = vmax.f32 %v102, 0.0
    %v105 = vld [vmem:[%s3] sm:$0xff]
    %v106 = vld [vmem:[%s4] sm:$0x1]
    %v108 = vperm.slane %v106, 0
    %vm110 = vcmask 64512
    %v112 = vsel %vm110, %v104, 0
    %114 = vmatpush.msra.mxu0 0.0
    %115 = vmatpush.msra.mxu0 0.0
    %116 = vmatpush.msra.mxu0 0.0
    %117 = vmatpush.msra.mxu0 0.0
    %118 = vmatpush.msra.mxu0 0.0
    %119 = vmatpush.msra.mxu0 0.0
    %120 = vmatpush.msra.mxu0 0.0
    %121 = vmatpush.msra.mxu0 0.0
    %122 = vmatpush.msra.mxu0 0.0
    %123 = vmatpush.msra.mxu0 0.0
    %124 = vmatpush.msra.mxu0 0.0
    %125 = vmatpush.msra.mxu0 0.0
    %126 = vmatpush.msra.mxu0 0.0
    %127 = vmatpush.msra.mxu0 0.0
    %128 = vmatpush.msra.mxu0 0.0
    %129 = vmatpush.msra.mxu0 %v105
    %130 = vmatmul.f32.gmra.mxu0 %v112
    %v131 = vpop.f32.mrf.mxu0
    %v132 = vadd.f32 %v108, %v131
    %133 = vdwg.mxu0
    %v134 = vadd.f32 %v132, 3.0
    %v135 = vmax.f32 %v134, 0.0
    %v136 = vmin.f32 %v135, 6.0
    %v137 = vmul.f32 %v136, 0.16666667
    %v138 = vperm.slane %v137, 0
    %v139 = vlaneseq
    %v140 = vshrl.u32 %v139, 7
    %142 = vset.pattern.permute.xlu0 %v140
    %143 = vperm.xlu0 %142, %v138
    %v144 = vpop.permute.xlu0 %143
    %v145 = vperm.slane %v137, 1
    %v146 = vlaneseq
    %v147 = vshrl.u32 %v146, 7
    %149 = vset.pattern.permute.xlu0 %v147
    %150 = vperm.xlu0 %149, %v145
    %v151 = vpop.permute.xlu0 %150
    %v155 = vunpack.c.l.s4 839922192
    %v156 = vunpack.c.0.s8 %v155
    %v157 = vperm.slane %v144, %v156
    %v159 = vunpack.c.l.s4 839922192
    %v160 = vunpack.c.0.s8 %v159
    %v161 = vperm.slane %v151, %v160
    %v164 = vmul.f32 %v37, %v157
    %v165 = vmul.f32 %v38, %v161
    %166 = vst [vmem:[#allocation5] sm:$0xff] %v164
    %167 = vst [vmem:[#allocation5 + $0x8] sm:$0xff] %v165
    // Predicated region
    $region26: #{tpu_custom_call.1} parent=1 // pred_check
      _
    $region27: #{tpu_custom_call.1} parent=1 // pred_check_branch
      %169 = sbr.rel (0) target = $region29
    $region28: #{tpu_custom_call.1} parent=1 // pred_region
      %171 = vsyncadd [#allocation4], 0
      %s172 = sshll.u32 [#allocation5], 4
      %s173 = int_to_ptr.vmem [resolvable:$true] %s172
      %s174 = sshll.u32 %s5, 4
      %s175 = int_to_ptr.hbm [resolvable:$true] %s174
      %180 = dma.vmem_to_hbm [thread:$0]  %s173, 256, %s175, [#allocation4], 128, 128, 8
    $region29: #{tpu_custom_call.1} parent=1 // pred_fallthru
      _
    // Predicated region
    $region30: #{tpu_custom_call.1} parent=1 // pred_check
      _
    $region31: #{tpu_custom_call.1} parent=1 // pred_check_branch
      %182 = sbr.rel (0) target = $region33
    $region32: #{tpu_custom_call.1} parent=1 // pred_region
      %184 = dma.done [#allocation4], 256
    $region33: #{tpu_custom_call.1} parent=1 // pred_fallthru
      _
    %185 = vsyncpa [#allocation3], 1
    %186 = vsyncpa [#allocation4], 1

</llo_original>
